<compile_context>
chip_gen: v7x
topology: tpu7x:2x2x1
jax: 0.10.0
libtpu: 0.0.40
codegen_flags: <defaults>
</compile_context>

<pallas_src>
import functools

import jax
import jax.numpy as jnp
from jax.experimental import pallas as pl
from jax.experimental.pallas import tpu as pltpu

LANE = 128


def _round_up(v, m):
    return -(-v // m) * m


def _cdiv(a, b):
    return -(-a // b)


# --------------------------------------------------------------------------
# Kernel
# --------------------------------------------------------------------------
def _intuition_kernel(n_layers, p_layers, p_int, p_out, off_layers,
                      it_ref, *refs):
    """Fused forward.

    refs = [x,
            fused0_W, fused0_b, coeff,                 # [int_W | W_0]
            (fusedW_j, fusedb_j) for j in 1..n-1,      # [W_j | gW_j | eW_{j+1}]
            out_W, out_b,
            fin_slab (f32: final|intuition), act_slab (bf16: per-layer acts)]
    """
    idx = 0
    x_ref = refs[idx]; idx += 1
    f0w_ref, f0b_ref, coeff_ref = refs[idx], refs[idx + 1], refs[idx + 2]
    idx += 3
    step_refs = []
    for _ in range(1, n_layers):
        step_refs.append((refs[idx], refs[idx + 1]))
        idx += 2
    outw_ref, outb_ref = refs[idx], refs[idx + 1]
    idx += 2
    fin_ref, act_ref = refs[idx], refs[idx + 1]

    it_parity = it_ref[0] % 2
    use_skip = it_parity == 1          # odd iteration -> gated skip path
    use_plain = it_parity == 0

    def store_act(j, val_f32):
        # 128-aligned, full-width bf16 store into the activation slab.
        act_ref[:, off_layers[j]:off_layers[j] + p_layers[j]] = (
            val_f32.astype(act_ref.dtype))

    # ---- step 0: fused (intuition head | layer 0) on shared LHS x ----------
    h0 = jnp.dot(x_ref[...], f0w_ref[...],
                 preferred_element_type=jnp.float32) + f0b_ref[...]
    fin_ref[:, p_out:p_out + p_int] = (
        jax.nn.sigmoid(h0[:, :p_int]) * coeff_ref[...])
    store_act(0, jnp.maximum(h0[:, p_int:p_int + p_layers[0]], 0.0))

    # ---- steps 1..n-1: one fused matmul per layer ---------------------------
    extra_next = None
    for j in range(1, n_layers):
        # Feed comes straight from the bf16 activation slab (VMEM-resident,
        # no f32 re-read / cast).
        x_in = act_ref[:, off_layers[j - 1]:off_layers[j - 1] + p_layers[j - 1]]
        wj_ref, bj_ref = step_refs[j - 1]
        h = jnp.dot(x_in, wj_ref[...],
                    preferred_element_type=jnp.float32) + bj_ref[...]

        col = p_layers[j]
        base = h[:, :col]
        gate_pre = None
        if j >= 2:
            gate_pre = h[:, col:col + p_layers[j]]
            col += p_layers[j]
        extra_cur = extra_next
        if 2 <= j + 1 <= n_layers - 1:
            extra_next = h[:, col:col + p_layers[j + 1]]   # extra for layer j+1
        else:
            extra_next = None

        if j >= 2:
            @pl.when(use_plain)
            def _(j=j, base=base):
                store_act(j, jnp.maximum(base, 0.0))

            @pl.when(use_skip)
            def _(j=j, base=base, gate_pre=gate_pre, extra_cur=extra_cur):
                gate = jax.nn.sigmoid(gate_pre)
                store_act(j, jnp.maximum(base + gate * extra_cur, 0.0))
        else:
            store_act(j, jnp.maximum(base, 0.0))

    # ---- output head --------------------------------------------------------
    x_last = act_ref[:, off_layers[-1]:off_layers[-1] + p_layers[-1]]
    fin_ref[:, :p_out] = jnp.dot(
        x_last, outw_ref[...], preferred_element_type=jnp.float32) + outb_ref[...]


# --------------------------------------------------------------------------
# One-time parameter packing (pad to 128 lanes, fuse shared-LHS matmuls, bf16)
# --------------------------------------------------------------------------
def pack_params(params, input_size, layer_sizes, num_labels):
    n = len(layer_sizes)
    pin = _round_up(input_size, LANE)
    p = [_round_up(s, LANE) for s in layer_sizes]
    p_int = _round_up(layer_sizes[-1], LANE)
    p_out = _round_up(num_labels, LANE)

    def pad_w(w, r, c):
        return jnp.pad(w, ((0, r - w.shape[0]), (0, c - w.shape[1])))

    def pad_b(b, c):
        return jnp.pad(b, ((0, 0), (0, c - b.shape[1])))

    arrays = []

    # step 0: intuition head and layer 0 share LHS x.
    w0, b0 = params["layers"][0]
    arrays.append(jnp.concatenate(
        [pad_w(params["int_W"], pin, p_int), pad_w(w0, pin, p[0])],
        axis=1).astype(jnp.bfloat16))
    arrays.append(jnp.concatenate(
        [pad_b(params["int_b"], p_int), pad_b(b0, p[0])], axis=1))
    arrays.append(pad_b(params["coeff"], p_int))

    # steps 1..n-1: fuse everything whose LHS is act_{j-1}:
    #   base_j (W_j), gate_j (gW_j, j>=2), extra_{j+1} (eW_{j+1}, j+1 in 2..n-1)
    for j in range(1, n):
        wj, bj = params["layers"][j]
        kdim = p[j - 1]
        parts_w = [pad_w(wj, kdim, p[j])]
        parts_b = [pad_b(bj, p[j])]
        if j >= 2:
            _, _, gw, gb = params["extras"][j - 2]
            parts_w.append(pad_w(gw, kdim, p[j]))
            parts_b.append(pad_b(gb, p[j]))
        if 2 <= j + 1 <= n - 1:
            ew, eb, _, _ = params["extras"][j + 1 - 2]
            parts_w.append(pad_w(ew, kdim, p[j + 1]))
            parts_b.append(pad_b(eb, p[j + 1]))
        arrays.append(jnp.concatenate(parts_w, axis=1).astype(jnp.bfloat16))
        arrays.append(jnp.concatenate(parts_b, axis=1))

    arrays.append(pad_w(params["out_W"], p[-1], p_out).astype(jnp.bfloat16))
    arrays.append(pad_b(params["out_b"], p_out))

    off_layers = []
    acc = 0
    for i in range(n):
        off_layers.append(acc)
        acc += p[i]

    cfg = dict(n_layers=n, pin=pin, p_layers=tuple(p), p_int=p_int, p_out=p_out,
               off_layers=tuple(off_layers), fin_w=p_out + p_int, act_w=acc)
    return cfg, arrays


# --------------------------------------------------------------------------
# Batch-tile selection: minimize padding; >=2 grid steps for large batches
# (so the "parallel" axis can span both v7x TensorCores).
# --------------------------------------------------------------------------
def _choose_batch_tiling(batch, desired_tile=1024):
    n_tiles = max(1, _cdiv(batch, desired_tile))
    if n_tiles == 1 and batch >= 512:
        n_tiles = 2
    tile_b = _round_up(_cdiv(batch, n_tiles), 8)
    return tile_b, n_tiles * tile_b, n_tiles


# --------------------------------------------------------------------------
# Wrapper
# --------------------------------------------------------------------------
def intuition_nn_forward(x, iteration, cfg, arrays, layer_sizes, num_labels,
                         desired_tile_b=1024):
    B, in_size = x.shape
    pin = cfg["pin"]
    n = cfg["n_layers"]
    p = cfg["p_layers"]
    p_int, p_out = cfg["p_int"], cfg["p_out"]
    fin_w, act_w = cfg["fin_w"], cfg["act_w"]

    tile_b, b_pad, n_tiles = _choose_batch_tiling(B, desired_tile_b)
    x_p = jnp.pad(x, ((0, b_pad - B), (0, pin - in_size))).astype(jnp.bfloat16)
    grid = (n_tiles,)

    in_specs = [pl.BlockSpec((tile_b, pin), lambda i, it: (i, 0))]
    for a in arrays:
        # Weights/biases stay VMEM-resident across the batch grid.
        in_specs.append(pl.BlockSpec(a.shape, lambda i, it: (0, 0)))
    out_specs = [pl.BlockSpec((tile_b, fin_w), lambda i, it: (i, 0)),
                 pl.BlockSpec((tile_b, act_w), lambda i, it: (i, 0))]
    out_shape = (jax.ShapeDtypeStruct((b_pad, fin_w), jnp.float32),
                 jax.ShapeDtypeStruct((b_pad, act_w), jnp.bfloat16))

    # Advisory cost estimate.
    mm = [(pin, p_int + p[0])]
    for j in range(1, n):
        w_n = p[j] + (p[j] if j >= 2 else 0) \
            + (p[j + 1] if 2 <= j + 1 <= n - 1 else 0)
        mm.append((p[j - 1], w_n))
    mm.append((p[-1], p_out))
    flops = 2 * b_pad * sum(k * m for k, m in mm)
    transcendentals = b_pad * (p_int + sum(p[j] for j in range(2, n)))
    weight_bytes = sum(a.size * a.dtype.itemsize for a in arrays)
    bytes_accessed = (x_p.size * 2 + weight_bytes
                      + b_pad * (fin_w * 4 + act_w * 2))

    # VMEM budget (double-buffered x + slabs, weights ~2x for default
    # buffering); cap at 48 MiB so the config also fits v7x's 64 MiB VMEM.
    vmem_need = (2 * tile_b * pin * 2 + 2 * weight_bytes
                 + 2 * tile_b * fin_w * 4 + 2 * tile_b * act_w * 2)
    vmem_limit = int(min(max(int(vmem_need * 1.5), 32 * 1024 * 1024),
                         48 * 1024 * 1024))

    kernel = functools.partial(
        _intuition_kernel, n, p, p_int, p_out, cfg["off_layers"])

    fin, act = pl.pallas_call(
        kernel,
        out_shape=out_shape,
        grid_spec=pltpu.PrefetchScalarGridSpec(
            num_scalar_prefetch=1,
            grid=grid,
            in_specs=in_specs,
            out_specs=out_specs),
        compiler_params=pltpu.CompilerParams(
            dimension_semantics=("parallel",),
            vmem_limit_bytes=vmem_limit),
        cost_estimate=pl.CostEstimate(flops=flops,
                                      transcendentals=transcendentals,
                                      bytes_accessed=bytes_accessed),
    )(jnp.asarray([iteration], dtype=jnp.int32), x_p, *arrays)

    off_l = cfg["off_layers"]
    final = fin[:B, :num_labels]
    intuition = fin[:B, p_out:p_out + layer_sizes[-1]]
    outputs = [act[:B, off_l[i]:off_l[i] + layer_sizes[i]].astype(jnp.float32)
               for i in range(len(layer_sizes))]
    return final, intuition, outputs


# --------------------------------------------------------------------------
# Pure-JAX reference (same bf16-operand / f32-accumulate numerics)
# --------------------------------------------------------------------------
def _mm(a, w, b):
    return jnp.dot(a.astype(jnp.bfloat16), w.astype(jnp.bfloat16),
                   preferred_element_type=jnp.float32) + b


def reference_forward(x, iteration, params):
    intuition = jax.nn.sigmoid(_mm(x, params["int_W"], params["int_b"])) * params["coeff"]
    outputs = []
    cur, x_prev, x_prev_prev = x, None, None
    for i, (w, b) in enumerate(params["layers"]):
        base = _mm(cur, w, b)
        if i > 1 and x_prev_prev is not None and iteration % 2 == 1:
            ew, eb, gw, gb = params["extras"][i - 2]
            extra = _mm(x_prev_prev, ew, eb)
            gate = jax.nn.sigmoid(_mm(x_prev, gw, gb))
            new = jax.nn.relu(base + gate * extra)
        else:
            new = jax.nn.relu(base)
        outputs.append(new)
        x_prev_prev, x_prev, cur = x_prev, new, new
    final = _mm(cur, params["out_W"], params["out_b"])
    return final, intuition, outputs


# --------------------------------------------------------------------------
# Deterministic parameter construction
# --------------------------------------------------------------------------
def make_params(key, input_size, layer_sizes, num_labels):
    def lin(k, fan_in, fan_out):
        kw, kb = jax.random.split(k)
        w = jax.random.normal(kw, (fan_in, fan_out), jnp.float32) * 0.1
        b = jax.random.normal(kb, (1, fan_out), jnp.float32) * 0.1
        return w, b

    n_keys = 3 + len(layer_sizes) + 2 * max(0, len(layer_sizes) - 2)
    keys = list(jax.random.split(key, n_keys))
    ki = iter(keys)

    params = {}
    params["int_W"], params["int_b"] = lin(next(ki), input_size, layer_sizes[-1])
    # Module initializes coefficients to zeros; use nonzero values here so the
    # intuition path is actually exercised by the numerical check.
    params["coeff"] = jax.random.normal(next(ki), (1, layer_sizes[-1]),
                                        jnp.float32) * 0.1
    params["out_W"], params["out_b"] = lin(next(ki), layer_sizes[-1], num_labels)

    params["layers"] = []
    for i in range(len(layer_sizes)):
        fan_in = layer_sizes[i - 1] if i > 0 else input_size
        params["layers"].append(lin(next(ki), fan_in, layer_sizes[i]))

    params["extras"] = []
    for i in range(2, len(layer_sizes)):
        ew, eb = lin(next(ki), layer_sizes[i - 2], layer_sizes[i])
        gw, gb = lin(next(ki), layer_sizes[i - 1], layer_sizes[i])
        params["extras"].append((ew, eb, gw, gb))
    return params


if __name__ == "__main__":
    input_size = 32
    layer_sizes = [32, 48, 64, 40]
    num_labels = 10
    batch = 8

    key = jax.random.PRNGKey(0)
    kx, kp = jax.random.split(key)
    x = jax.random.normal(kx, (batch, input_size), jnp.float32)
    params = make_params(kp, input_size, layer_sizes, num_labels)
    cfg, packed = pack_params(params, input_size, layer_sizes, num_labels)

    ok = True
    for iteration in (2, 3):  # even (plain path) and odd (gated skip path)
        final, intuition, outputs = intuition_nn_forward(
            x, iteration, cfg, packed, layer_sizes, num_labels)
        jax.block_until_ready(final)
        r_final, r_intuition, r_outputs = reference_forward(x, iteration, params)
        ok &= bool(jnp.allclose(final, r_final, atol=1e-3, rtol=1e-3))
        ok &= bool(jnp.allclose(intuition, r_intuition, atol=1e-3, rtol=1e-3))
        for o, ro in zip(outputs, r_outputs):
            # Per-layer activations come back from the bf16 slab; tolerance
            # reflects bf16 rounding (~4e-3 relative).
            ok &= bool(jnp.allclose(o, ro, atol=1e-2, rtol=1e-2))

    print("KERNEL_OK" if ok else "KERNEL_MISMATCH")
</pallas_src>

<mosaic_0001>
module attributes {stable_mosaic.version = 11 : i64} {
  func.func @_intuition_kernel(%arg0: i32, %arg1: memref<1xi32, #tpu.memory_space<smem>>, %arg2: memref<8x128xbf16, #tpu.memory_space<vmem>>, %arg3: memref<128x256xbf16, #tpu.memory_space<vmem>>, %arg4: memref<1x256xf32, #tpu.memory_space<vmem>>, %arg5: memref<1x128xf32, #tpu.memory_space<vmem>>, %arg6: memref<128x256xbf16, #tpu.memory_space<vmem>>, %arg7: memref<1x256xf32, #tpu.memory_space<vmem>>, %arg8: memref<128x384xbf16, #tpu.memory_space<vmem>>, %arg9: memref<1x384xf32, #tpu.memory_space<vmem>>, %arg10: memref<128x256xbf16, #tpu.memory_space<vmem>>, %arg11: memref<1x256xf32, #tpu.memory_space<vmem>>, %arg12: memref<128x128xbf16, #tpu.memory_space<vmem>>, %arg13: memref<1x128xf32, #tpu.memory_space<vmem>>, %arg14: memref<8x256xf32, #tpu.memory_space<vmem>>, %arg15: memref<8x512xbf16, #tpu.memory_space<vmem>>) attributes {dimension_semantics = [#tpu.dimension_semantics<parallel>], iteration_bounds = array<i64: 1>, scalar_prefetch = 1 : i64, scratch_operands = 0 : i64, tpu.core_type = #tpu.core_type<tc>, window_params = [{transform_indices = @transform_0, window_bounds = array<i64: 8, 128>}, {pipeline_mode = #tpu.pipeline_mode<synchronous>, transform_indices = @transform_1, window_bounds = array<i64: 128, 256>}, {pipeline_mode = #tpu.pipeline_mode<synchronous>, transform_indices = @transform_2, window_bounds = array<i64: 1, 256>}, {pipeline_mode = #tpu.pipeline_mode<synchronous>, transform_indices = @transform_3, window_bounds = array<i64: 1, 128>}, {pipeline_mode = #tpu.pipeline_mode<synchronous>, transform_indices = @transform_4, window_bounds = array<i64: 128, 256>}, {pipeline_mode = #tpu.pipeline_mode<synchronous>, transform_indices = @transform_5, window_bounds = array<i64: 1, 256>}, {pipeline_mode = #tpu.pipeline_mode<synchronous>, transform_indices = @transform_6, window_bounds = array<i64: 128, 384>}, {pipeline_mode = #tpu.pipeline_mode<synchronous>, transform_indices = @transform_7, window_bounds = array<i64: 1, 384>}, {pipeline_mode = #tpu.pipeline_mode<synchronous>, transform_indices = @transform_8, window_bounds = array<i64: 128, 256>}, {pipeline_mode = #tpu.pipeline_mode<synchronous>, transform_indices = @transform_9, window_bounds = array<i64: 1, 256>}, {pipeline_mode = #tpu.pipeline_mode<synchronous>, transform_indices = @transform_10, window_bounds = array<i64: 128, 128>}, {pipeline_mode = #tpu.pipeline_mode<synchronous>, transform_indices = @transform_11, window_bounds = array<i64: 1, 128>}, {transform_indices = @transform_12, window_bounds = array<i64: 8, 256>}, {transform_indices = @transform_13, window_bounds = array<i64: 8, 512>}]} {
    %c0 = arith.constant 0 : index
    %0 = memref.load %arg1[%c0] : memref<1xi32, #tpu.memory_space<smem>>
    %c2_i32 = arith.constant 2 : i32
    %c0_i32 = arith.constant 0 : i32
    %1 = arith.cmpi eq, %c2_i32, %c0_i32 : i32
    %c1_i32 = arith.constant 1 : i32
    %2 = arith.select %1, %c1_i32, %c2_i32 : i32
    %3 = arith.remsi %0, %2 : i32
    %c0_i32_0 = arith.constant 0 : i32
    %4 = arith.cmpi ne, %3, %c0_i32_0 : i32
    %c0_i32_1 = arith.constant 0 : i32
    %5 = arith.cmpi slt, %3, %c0_i32_1 : i32
    %c0_i32_2 = arith.constant 0 : i32
    %6 = arith.cmpi slt, %2, %c0_i32_2 : i32
    %7 = arith.xori %5, %6 : i1
    %8 = arith.andi %7, %4 : i1
    %9 = arith.addi %3, %2 : i32
    %10 = arith.select %8, %9, %3 : i32
    %c1_i32_3 = arith.constant 1 : i32
    %11 = arith.cmpi eq, %10, %c1_i32_3 : i32
    %c0_i32_4 = arith.constant 0 : i32
    %12 = arith.cmpi eq, %10, %c0_i32_4 : i32
    %c0_5 = arith.constant 0 : index
    %c0_6 = arith.constant 0 : index
    %13 = vector.load %arg2[%c0_5, %c0_6] : memref<8x128xbf16, #tpu.memory_space<vmem>>, vector<8x128xbf16>
    %c0_7 = arith.constant 0 : index
    %c0_8 = arith.constant 0 : index
    %14 = vector.load %arg3[%c0_7, %c0_8] : memref<128x256xbf16, #tpu.memory_space<vmem>>, vector<128x256xbf16>
    %cst = arith.constant dense<0.000000e+00> : vector<8x256xf32>
    %15 = tpu.matmul %13, %14, %cst {dimension_numbers = #tpu.dot_dimension_numbers<[1], [0], [0], [1], [0, 0, 1, 1], [], []>} : vector<8x128xbf16>, vector<128x256xbf16>, vector<8x256xf32> -> vector<8x256xf32>
    %c0_9 = arith.constant 0 : index
    %c0_10 = arith.constant 0 : index
    %16 = vector.load %arg4[%c0_9, %c0_10] : memref<1x256xf32, #tpu.memory_space<vmem>>, vector<1x256xf32>
    %17 = vector.broadcast %16 : vector<1x256xf32> to vector<8x256xf32>
    %18 = arith.addf %15, %17 : vector<8x256xf32>
    %19 = vector.extract_strided_slice %18 {offsets = [0, 0], sizes = [8, 128], strides = [1, 1]} : vector<8x256xf32> to vector<8x128xf32>
    %20 = arith.negf %19 : vector<8x128xf32>
    %21 = math.exp %20 : vector<8x128xf32>
    %cst_11 = arith.constant 1.000000e+00 : f32
    %22 = vector.broadcast %cst_11 : f32 to vector<8x128xf32>
    %23 = arith.addf %22, %21 : vector<8x128xf32>
    %24 = arith.divf %22, %23 : vector<8x128xf32>
    %c0_12 = arith.constant 0 : index
    %c0_13 = arith.constant 0 : index
    %25 = vector.load %arg5[%c0_12, %c0_13] : memref<1x128xf32, #tpu.memory_space<vmem>>, vector<1x128xf32>
    %26 = vector.broadcast %25 : vector<1x128xf32> to vector<8x128xf32>
    %27 = arith.mulf %24, %26 : vector<8x128xf32>
    %c0_14 = arith.constant 0 : index
    %c128 = arith.constant 128 : index
    %28 = vector.load %arg14[%c0_14, %c128] : memref<8x256xf32, #tpu.memory_space<vmem>>, vector<8x128xf32>
    tpu.vector_store %arg14[%c0_14, %c128], %27 {strides = array<i32>} : memref<8x256xf32, #tpu.memory_space<vmem>>, vector<8x128xf32>,
    %29 = vector.extract_strided_slice %18 {offsets = [0, 128], sizes = [8, 128], strides = [1, 1]} : vector<8x256xf32> to vector<8x128xf32>
    %cst_15 = arith.constant 0.000000e+00 : f32
    %30 = vector.broadcast %cst_15 : f32 to vector<8x128xf32>
    %31 = arith.maximumf %29, %30 : vector<8x128xf32>
    %32 = arith.truncf %31 : vector<8x128xf32> to vector<8x128xbf16>
    %c0_16 = arith.constant 0 : index
    %c0_17 = arith.constant 0 : index
    %33 = vector.load %arg15[%c0_16, %c0_17] : memref<8x512xbf16, #tpu.memory_space<vmem>>, vector<8x128xbf16>
    tpu.vector_store %arg15[%c0_16, %c0_17], %32 {strides = array<i32>} : memref<8x512xbf16, #tpu.memory_space<vmem>>, vector<8x128xbf16>,
    %c0_18 = arith.constant 0 : index
    %c0_19 = arith.constant 0 : index
    %34 = vector.load %arg15[%c0_18, %c0_19] : memref<8x512xbf16, #tpu.memory_space<vmem>>, vector<8x128xbf16>
    %c0_20 = arith.constant 0 : index
    %c0_21 = arith.constant 0 : index
    %35 = vector.load %arg6[%c0_20, %c0_21] : memref<128x256xbf16, #tpu.memory_space<vmem>>, vector<128x256xbf16>
    %cst_22 = arith.constant dense<0.000000e+00> : vector<8x256xf32>
    %36 = tpu.matmul %34, %35, %cst_22 {dimension_numbers = #tpu.dot_dimension_numbers<[1], [0], [0], [1], [0, 0, 1, 1], [], []>} : vector<8x128xbf16>, vector<128x256xbf16>, vector<8x256xf32> -> vector<8x256xf32>
    %c0_23 = arith.constant 0 : index
    %c0_24 = arith.constant 0 : index
    %37 = vector.load %arg7[%c0_23, %c0_24] : memref<1x256xf32, #tpu.memory_space<vmem>>, vector<1x256xf32>
    %38 = vector.broadcast %37 : vector<1x256xf32> to vector<8x256xf32>
    %39 = arith.addf %36, %38 : vector<8x256xf32>
    %40 = vector.extract_strided_slice %39 {offsets = [0, 0], sizes = [8, 128], strides = [1, 1]} : vector<8x256xf32> to vector<8x128xf32>
    %41 = vector.extract_strided_slice %39 {offsets = [0, 128], sizes = [8, 128], strides = [1, 1]} : vector<8x256xf32> to vector<8x128xf32>
    %cst_25 = arith.constant 0.000000e+00 : f32
    %42 = vector.broadcast %cst_25 : f32 to vector<8x128xf32>
    %43 = arith.maximumf %40, %42 : vector<8x128xf32>
    %44 = arith.truncf %43 : vector<8x128xf32> to vector<8x128xbf16>
    %c0_26 = arith.constant 0 : index
    %c128_27 = arith.constant 128 : index
    %45 = vector.load %arg15[%c0_26, %c128_27] : memref<8x512xbf16, #tpu.memory_space<vmem>>, vector<8x128xbf16>
    tpu.vector_store %arg15[%c0_26, %c128_27], %44 {strides = array<i32>} : memref<8x512xbf16, #tpu.memory_space<vmem>>, vector<8x128xbf16>,
    %c0_28 = arith.constant 0 : index
    %c128_29 = arith.constant 128 : index
    %46 = vector.load %arg15[%c0_28, %c128_29] : memref<8x512xbf16, #tpu.memory_space<vmem>>, vector<8x128xbf16>
    %c0_30 = arith.constant 0 : index
    %c0_31 = arith.constant 0 : index
    %47 = vector.load %arg8[%c0_30, %c0_31] : memref<128x384xbf16, #tpu.memory_space<vmem>>, vector<128x384xbf16>
    %cst_32 = arith.constant dense<0.000000e+00> : vector<8x384xf32>
    %48 = tpu.matmul %46, %47, %cst_32 {dimension_numbers = #tpu.dot_dimension_numbers<[1], [0], [0], [1], [0, 0, 1, 1], [], []>} : vector<8x128xbf16>, vector<128x384xbf16>, vector<8x384xf32> -> vector<8x384xf32>
    %c0_33 = arith.constant 0 : index
    %c0_34 = arith.constant 0 : index
    %49 = vector.load %arg9[%c0_33, %c0_34] : memref<1x384xf32, #tpu.memory_space<vmem>>, vector<1x384xf32>
    %50 = vector.broadcast %49 : vector<1x384xf32> to vector<8x384xf32>
    %51 = arith.addf %48, %50 : vector<8x384xf32>
    %52 = vector.extract_strided_slice %51 {offsets = [0, 0], sizes = [8, 128], strides = [1, 1]} : vector<8x384xf32> to vector<8x128xf32>
    %53 = vector.extract_strided_slice %51 {offsets = [0, 128], sizes = [8, 128], strides = [1, 1]} : vector<8x384xf32> to vector<8x128xf32>
    %54 = vector.extract_strided_slice %51 {offsets = [0, 256], sizes = [8, 128], strides = [1, 1]} : vector<8x384xf32> to vector<8x128xf32>
    %55 = arith.extui %12 : i1 to i32
    %c0_i32_35 = arith.constant 0 : i32
    %56 = arith.cmpi ne, %55, %c0_i32_35 : i32
    scf.if %56 {
      %cst_53 = arith.constant 0.000000e+00 : f32
      %78 = vector.broadcast %cst_53 : f32 to vector<8x128xf32>
      %79 = arith.maximumf %52, %78 : vector<8x128xf32>
      %80 = arith.truncf %79 : vector<8x128xf32> to vector<8x128xbf16>
      %c0_54 = arith.constant 0 : index
      %c256_55 = arith.constant 256 : index
      %81 = vector.load %arg15[%c0_54, %c256_55] : memref<8x512xbf16, #tpu.memory_space<vmem>>, vector<8x128xbf16>
      tpu.vector_store %arg15[%c0_54, %c256_55], %80 {strides = array<i32>} : memref<8x512xbf16, #tpu.memory_space<vmem>>, vector<8x128xbf16>,
    } else {
    }
    %57 = arith.extui %11 : i1 to i32
    %c0_i32_36 = arith.constant 0 : i32
    %58 = arith.cmpi ne, %57, %c0_i32_36 : i32
    scf.if %58 {
      %78 = arith.negf %53 : vector<8x128xf32>
      %79 = math.exp %78 : vector<8x128xf32>
      %cst_53 = arith.constant 1.000000e+00 : f32
      %80 = vector.broadcast %cst_53 : f32 to vector<8x128xf32>
      %81 = arith.addf %80, %79 : vector<8x128xf32>
      %82 = arith.divf %80, %81 : vector<8x128xf32>
      %83 = arith.mulf %82, %41 : vector<8x128xf32>
      %84 = arith.addf %52, %83 : vector<8x128xf32>
      %cst_54 = arith.constant 0.000000e+00 : f32
      %85 = vector.broadcast %cst_54 : f32 to vector<8x128xf32>
      %86 = arith.maximumf %84, %85 : vector<8x128xf32>
      %87 = arith.truncf %86 : vector<8x128xf32> to vector<8x128xbf16>
      %c0_55 = arith.constant 0 : index
      %c256_56 = arith.constant 256 : index
      %88 = vector.load %arg15[%c0_55, %c256_56] : memref<8x512xbf16, #tpu.memory_space<vmem>>, vector<8x128xbf16>
      tpu.vector_store %arg15[%c0_55, %c256_56], %87 {strides = array<i32>} : memref<8x512xbf16, #tpu.memory_space<vmem>>, vector<8x128xbf16>,
    } else {
    }
    %c0_37 = arith.constant 0 : index
    %c256 = arith.constant 256 : index
    %59 = vector.load %arg15[%c0_37, %c256] : memref<8x512xbf16, #tpu.memory_space<vmem>>, vector<8x128xbf16>
    %c0_38 = arith.constant 0 : index
    %c0_39 = arith.constant 0 : index
    %60 = vector.load %arg10[%c0_38, %c0_39] : memref<128x256xbf16, #tpu.memory_space<vmem>>, vector<128x256xbf16>
    %cst_40 = arith.constant dense<0.000000e+00> : vector<8x256xf32>
    %61 = tpu.matmul %59, %60, %cst_40 {dimension_numbers = #tpu.dot_dimension_numbers<[1], [0], [0], [1], [0, 0, 1, 1], [], []>} : vector<8x128xbf16>, vector<128x256xbf16>, vector<8x256xf32> -> vector<8x256xf32>
    %c0_41 = arith.constant 0 : index
    %c0_42 = arith.constant 0 : index
    %62 = vector.load %arg11[%c0_41, %c0_42] : memref<1x256xf32, #tpu.memory_space<vmem>>, vector<1x256xf32>
    %63 = vector.broadcast %62 : vector<1x256xf32> to vector<8x256xf32>
    %64 = arith.addf %61, %63 : vector<8x256xf32>
    %65 = vector.extract_strided_slice %64 {offsets = [0, 0], sizes = [8, 128], strides = [1, 1]} : vector<8x256xf32> to vector<8x128xf32>
    %66 = vector.extract_strided_slice %64 {offsets = [0, 128], sizes = [8, 128], strides = [1, 1]} : vector<8x256xf32> to vector<8x128xf32>
    %67 = arith.extui %12 : i1 to i32
    %c0_i32_43 = arith.constant 0 : i32
    %68 = arith.cmpi ne, %67, %c0_i32_43 : i32
    scf.if %68 {
      %cst_53 = arith.constant 0.000000e+00 : f32
      %78 = vector.broadcast %cst_53 : f32 to vector<8x128xf32>
      %79 = arith.maximumf %65, %78 : vector<8x128xf32>
      %80 = arith.truncf %79 : vector<8x128xf32> to vector<8x128xbf16>
      %c0_54 = arith.constant 0 : index
      %c384_55 = arith.constant 384 : index
      %81 = vector.load %arg15[%c0_54, %c384_55] : memref<8x512xbf16, #tpu.memory_space<vmem>>, vector<8x128xbf16>
      tpu.vector_store %arg15[%c0_54, %c384_55], %80 {strides = array<i32>} : memref<8x512xbf16, #tpu.memory_space<vmem>>, vector<8x128xbf16>,
    } else {
    }
    %69 = arith.extui %11 : i1 to i32
    %c0_i32_44 = arith.constant 0 : i32
    %70 = arith.cmpi ne, %69, %c0_i32_44 : i32
    scf.if %70 {
      %78 = arith.negf %66 : vector<8x128xf32>
      %79 = math.exp %78 : vector<8x128xf32>
      %cst_53 = arith.constant 1.000000e+00 : f32
      %80 = vector.broadcast %cst_53 : f32 to vector<8x128xf32>
      %81 = arith.addf %80, %79 : vector<8x128xf32>
      %82 = arith.divf %80, %81 : vector<8x128xf32>
      %83 = arith.mulf %82, %54 : vector<8x128xf32>
      %84 = arith.addf %65, %83 : vector<8x128xf32>
      %cst_54 = arith.constant 0.000000e+00 : f32
      %85 = vector.broadcast %cst_54 : f32 to vector<8x128xf32>
      %86 = arith.maximumf %84, %85 : vector<8x128xf32>
      %87 = arith.truncf %86 : vector<8x128xf32> to vector<8x128xbf16>
      %c0_55 = arith.constant 0 : index
      %c384_56 = arith.constant 384 : index
      %88 = vector.load %arg15[%c0_55, %c384_56] : memref<8x512xbf16, #tpu.memory_space<vmem>>, vector<8x128xbf16>
      tpu.vector_store %arg15[%c0_55, %c384_56], %87 {strides = array<i32>} : memref<8x512xbf16, #tpu.memory_space<vmem>>, vector<8x128xbf16>,
    } else {
    }
    %c0_45 = arith.constant 0 : index
    %c384 = arith.constant 384 : index
    %71 = vector.load %arg15[%c0_45, %c384] : memref<8x512xbf16, #tpu.memory_space<vmem>>, vector<8x128xbf16>
    %c0_46 = arith.constant 0 : index
    %c0_47 = arith.constant 0 : index
    %72 = vector.load %arg12[%c0_46, %c0_47] : memref<128x128xbf16, #tpu.memory_space<vmem>>, vector<128x128xbf16>
    %cst_48 = arith.constant dense<0.000000e+00> : vector<8x128xf32>
    %73 = tpu.matmul %71, %72, %cst_48 {dimension_numbers = #tpu.dot_dimension_numbers<[1], [0], [0], [1], [0, 0, 1, 1], [], []>} : vector<8x128xbf16>, vector<128x128xbf16>, vector<8x128xf32> -> vector<8x128xf32>
    %c0_49 = arith.constant 0 : index
    %c0_50 = arith.constant 0 : index
    %74 = vector.load %arg13[%c0_49, %c0_50] : memref<1x128xf32, #tpu.memory_space<vmem>>, vector<1x128xf32>
    %75 = vector.broadcast %74 : vector<1x128xf32> to vector<8x128xf32>
    %76 = arith.addf %73, %75 : vector<8x128xf32>
    %c0_51 = arith.constant 0 : index
    %c0_52 = arith.constant 0 : index
    %77 = vector.load %arg14[%c0_51, %c0_52] : memref<8x256xf32, #tpu.memory_space<vmem>>, vector<8x128xf32>
    tpu.vector_store %arg14[%c0_51, %c0_52], %76 {strides = array<i32>} : memref<8x256xf32, #tpu.memory_space<vmem>>, vector<8x128xf32>,
    return
  }
  func.func @transform_0(%arg0: i32, %arg1: memref<1xi32, #tpu.memory_space<smem>>) -> (i32, i32) {
    %c0_i32 = arith.constant 0 : i32
    %c0_i32_0 = arith.constant 0 : i32
    return %arg0, %c0_i32 : i32, i32
  }
  func.func @transform_1(%arg0: i32, %arg1: memref<1xi32, #tpu.memory_space<smem>>) -> (i32, i32) {
    %c0_i32 = arith.constant 0 : i32
    %c0_i32_0 = arith.constant 0 : i32
    %c0_i32_1 = arith.constant 0 : i32
    return %c0_i32, %c0_i32_0 : i32, i32
  }
  func.func @transform_2(%arg0: i32, %arg1: memref<1xi32, #tpu.memory_space<smem>>) -> (i32, i32) {
    %c0_i32 = arith.constant 0 : i32
    %c0_i32_0 = arith.constant 0 : i32
    %c0_i32_1 = arith.constant 0 : i32
    return %c0_i32, %c0_i32_0 : i32, i32
  }
  func.func @transform_3(%arg0: i32, %arg1: memref<1xi32, #tpu.memory_space<smem>>) -> (i32, i32) {
    %c0_i32 = arith.constant 0 : i32
    %c0_i32_0 = arith.constant 0 : i32
    %c0_i32_1 = arith.constant 0 : i32
    return %c0_i32, %c0_i32_0 : i32, i32
  }
  func.func @transform_4(%arg0: i32, %arg1: memref<1xi32, #tpu.memory_space<smem>>) -> (i32, i32) {
    %c0_i32 = arith.constant 0 : i32
    %c0_i32_0 = arith.constant 0 : i32
    %c0_i32_1 = arith.constant 0 : i32
    return %c0_i32, %c0_i32_0 : i32, i32
  }
  func.func @transform_5(%arg0: i32, %arg1: memref<1xi32, #tpu.memory_space<smem>>) -> (i32, i32) {
    %c0_i32 = arith.constant 0 : i32
    %c0_i32_0 = arith.constant 0 : i32
    %c0_i32_1 = arith.constant 0 : i32
    return %c0_i32, %c0_i32_0 : i32, i32
  }
  func.func @transform_6(%arg0: i32, %arg1: memref<1xi32, #tpu.memory_space<smem>>) -> (i32, i32) {
    %c0_i32 = arith.constant 0 : i32
    %c0_i32_0 = arith.constant 0 : i32
    %c0_i32_1 = arith.constant 0 : i32
    return %c0_i32, %c0_i32_0 : i32, i32
  }
  func.func @transform_7(%arg0: i32, %arg1: memref<1xi32, #tpu.memory_space<smem>>) -> (i32, i32) {
    %c0_i32 = arith.constant 0 : i32
    %c0_i32_0 = arith.constant 0 : i32
    %c0_i32_1 = arith.constant 0 : i32
    return %c0_i32, %c0_i32_0 : i32, i32
  }
  func.func @transform_8(%arg0: i32, %arg1: memref<1xi32, #tpu.memory_space<smem>>) -> (i32, i32) {
    %c0_i32 = arith.constant 0 : i32
    %c0_i32_0 = arith.constant 0 : i32
    %c0_i32_1 = arith.constant 0 : i32
    return %c0_i32, %c0_i32_0 : i32, i32
  }
  func.func @transform_9(%arg0: i32, %arg1: memref<1xi32, #tpu.memory_space<smem>>) -> (i32, i32) {
    %c0_i32 = arith.constant 0 : i32
    %c0_i32_0 = arith.constant 0 : i32
    %c0_i32_1 = arith.constant 0 : i32
    return %c0_i32, %c0_i32_0 : i32, i32
  }
  func.func @transform_10(%arg0: i32, %arg1: memref<1xi32, #tpu.memory_space<smem>>) -> (i32, i32) {
    %c0_i32 = arith.constant 0 : i32
    %c0_i32_0 = arith.constant 0 : i32
    %c0_i32_1 = arith.constant 0 : i32
    return %c0_i32, %c0_i32_0 : i32, i32
  }
  func.func @transform_11(%arg0: i32, %arg1: memref<1xi32, #tpu.memory_space<smem>>) -> (i32, i32) {
    %c0_i32 = arith.constant 0 : i32
    %c0_i32_0 = arith.constant 0 : i32
    %c0_i32_1 = arith.constant 0 : i32
    return %c0_i32, %c0_i32_0 : i32, i32
  }
  func.func @transform_12(%arg0: i32, %arg1: memref<1xi32, #tpu.memory_space<smem>>) -> (i32, i32) {
    %c0_i32 = arith.constant 0 : i32
    %c0_i32_0 = arith.constant 0 : i32
    return %arg0, %c0_i32 : i32, i32
  }
  func.func @transform_13(%arg0: i32, %arg1: memref<1xi32, #tpu.memory_space<smem>>) -> (i32, i32) {
    %c0_i32 = arith.constant 0 : i32
    %c0_i32_0 = arith.constant 0 : i32
    return %arg0, %c0_i32 : i32, i32
  }
}

</mosaic_0001>

<llo_original>
// kernel: tpu_custom_call.1
$region0: #{tpu_custom_call.1}
  #allocation0 [shape = 'u32[]', space=smem, size = 0x4, offset = 0x4, fixed_abs, tag = 'smem constant byte address 0x4 - core index']
  #allocation1 [shape = 'u32[144,128]{1,0:T(1,128)}', space=vmem, size = 0x12000, scoped, tag = 'internal scratch']
  #allocation2 [shape = 's32[1]{0}', space=sflag, size = 0x4, scoped, tag = 'scoped memory for tpu_custom_call.1']
  #allocation3 [shape = 's32[1]{0:T(128)S(6)}', space=smem, size = 0x200, scoped, tag = 'prefetched SMEM operand 0']
  %s0 = inlined_call_operand.<no memory space> [shape: s32[1], index: 0, kind: input, shape index: {}]
  %s1 = inlined_call_operand.hbm [shape: bf16[8,128], index: 1, kind: input, shape index: {}]
  %s2 = inlined_call_operand.hbm [shape: bf16[128,256], index: 2, kind: input, shape index: {}]
  %s3 = inlined_call_operand.vmem [shape: f32[1,256], index: 3, kind: input, shape index: {}]
  %s4 = inlined_call_operand.vmem [shape: f32[1,128], index: 4, kind: input, shape index: {}]
  %s5 = inlined_call_operand.hbm [shape: bf16[128,256], index: 5, kind: input, shape index: {}]
  %s6 = inlined_call_operand.vmem [shape: f32[1,256], index: 6, kind: input, shape index: {}]
  %s7 = inlined_call_operand.hbm [shape: bf16[128,384], index: 7, kind: input, shape index: {}]
  %s8 = inlined_call_operand.vmem [shape: f32[1,384], index: 8, kind: input, shape index: {}]
  %s9 = inlined_call_operand.hbm [shape: bf16[128,256], index: 9, kind: input, shape index: {}]
  %s10 = inlined_call_operand.vmem [shape: f32[1,256], index: 10, kind: input, shape index: {}]
  %s11 = inlined_call_operand.hbm [shape: bf16[128,128], index: 11, kind: input, shape index: {}]
  %s12 = inlined_call_operand.vmem [shape: f32[1,128], index: 12, kind: input, shape index: {}]
  %s13 = inlined_call_operand.hbm [shape: f32[8,256], index: 13, kind: output, shape index: {0}]
  %s14 = inlined_call_operand.hbm [shape: bf16[8,512], index: 14, kind: output, shape index: {1}]
  %15 = xla_tuple %s13, %s14
  %s16 = sld [smem:[#allocation0]]
  $region106: #{tpu_custom_call.1} parent=0
    _
  %s18 = ssub.s32 1, %s16
  %s19 = scalar_select 0, %s18, %s16
  %20 = sst [smem:[#allocation3]] %s0
  $region1: #{tpu_custom_call.1} parent=0
    #allocation4 [shape = 'u8[2048]{0}', space=vmem, size = 0x800, scoped, tag = 'input window, operand 1, single buffered']
    #allocation5 [shape = 's32[1]{0}', space=sflag, size = 0x4, scoped, tag = 'scoped memory for tpu_custom_call.1']
    #allocation6 [shape = 's32[1]{0}', space=sflag, size = 0x4, scoped, tag = 'scoped memory for tpu_custom_call.1']
    #allocation7 [shape = 'u8[65536]{0}', space=vmem, size = 0x10000, scoped, tag = 'input window, operand 2, single buffered']
    #allocation8 [shape = 's32[1]{0}', space=sflag, size = 0x4, scoped, tag = 'scoped memory for tpu_custom_call.1']
    #allocation9 [shape = 'u8[65536]{0}', space=vmem, size = 0x10000, scoped, tag = 'input window, operand 5, single buffered']
    #allocation10 [shape = 'u8[98304]{0}', space=vmem, size = 0x18000, scoped, tag = 'input window, operand 7, single buffered']
    #allocation11 [shape = 's32[1]{0}', space=sflag, size = 0x4, scoped, tag = 'scoped memory for tpu_custom_call.1']
    #allocation12 [shape = 'u8[65536]{0}', space=vmem, size = 0x10000, scoped, tag = 'input window, operand 9, single buffered']
    #allocation13 [shape = 'u8[32768]{0}', space=vmem, size = 0x8000, scoped, tag = 'input window, operand 11, single buffered']
    #allocation14 [shape = 's32[1]{0}', space=sflag, size = 0x4, scoped, tag = 'scoped memory for tpu_custom_call.1']
    #allocation15 [shape = 'u8[8192]{0}', space=vmem, size = 0x2000, scoped, tag = 'output window, operand 0, single buffered']
    #allocation16 [shape = 'u8[8192]{0}', space=vmem, size = 0x2000, scoped, tag = 'output window, operand 1, single buffered']
    #allocation17 [shape = 's32[1]{0}', space=sflag, size = 0x4, scoped, tag = 'scoped memory for tpu_custom_call.1']
    %21 = vsyncpa [#allocation5], 0
    %22 = vsyncpa [#allocation8], 0
    %23 = vsyncpa [#allocation11], 0
    %24 = vsyncpa [#allocation14], 0
    %25 = vsyncpa [#allocation6], 0
    %26 = vsyncpa [#allocation17], 0
    // Predicated region
    $region2: #{tpu_custom_call.1} parent=1 // pred_check
      _
    $region3: #{tpu_custom_call.1} parent=1 // pred_check_branch
      %28 = sbr.rel (0) target = $region5
    $region4: #{tpu_custom_call.1} parent=1 // pred_region
      %s30 = ssub.s32 64, 64
      %31 = vsyncadd [#allocation5], %s30
      %s33 = sshll.u32 [#allocation4], 4
      %s34 = int_to_ptr.vmem [resolvable:$true] %s33
      %36 = dma.hbm_to_vmem [thread:$0]  %s1, 64, %s34, [#allocation5]
    $region5: #{tpu_custom_call.1} parent=1 // pred_fallthru
      _
    // Predicated region
    $region6: #{tpu_custom_call.1} parent=1 // pred_check
      _
    $region7: #{tpu_custom_call.1} parent=1 // pred_check_branch
      %38 = sbr.rel (0) target = $region9
    $region8: #{tpu_custom_call.1} parent=1 // pred_region
      %s40 = ssub.s32 2048, 2048
      %41 = vsyncadd [#allocation8], %s40
      %s42 = sshll.u32 [#allocation7], 4
      %s43 = int_to_ptr.vmem [resolvable:$true] %s42
      %48 = dma.hbm_to_vmem [thread:$0]  %s2, 2048, %s43, [#allocation8], 128, 128, 8
    $region9: #{tpu_custom_call.1} parent=1 // pred_fallthru
      _
    // Predicated region
    $region10: #{tpu_custom_call.1} parent=1 // pred_check
      _
    $region11: #{tpu_custom_call.1} parent=1 // pred_check_branch
      %50 = sbr.rel (0) target = $region13
    $region12: #{tpu_custom_call.1} parent=1 // pred_region
      _
    $region13: #{tpu_custom_call.1} parent=1 // pred_fallthru
      _
    // Predicated region
    $region14: #{tpu_custom_call.1} parent=1 // pred_check
      _
    $region15: #{tpu_custom_call.1} parent=1 // pred_check_branch
      %52 = sbr.rel (0) target = $region17
    $region16: #{tpu_custom_call.1} parent=1 // pred_region
      _
    $region17: #{tpu_custom_call.1} parent=1 // pred_fallthru
      _
    // Predicated region
    $region18: #{tpu_custom_call.1} parent=1 // pred_check
      _
    $region19: #{tpu_custom_call.1} parent=1 // pred_check_branch
      %54 = sbr.rel (0) target = $region21
    $region20: #{tpu_custom_call.1} parent=1 // pred_region
      %s56 = ssub.s32 2048, 2048
      %57 = vsyncadd [#allocation8], %s56
      %s58 = sshll.u32 [#allocation9], 4
      %s59 = int_to_ptr.vmem [resolvable:$true] %s58
      %64 = dma.hbm_to_vmem [thread:$0]  %s5, 2048, %s59, [#allocation8], 128, 128, 8
    $region21: #{tpu_custom_call.1} parent=1 // pred_fallthru
      _
    // Predicated region
    $region22: #{tpu_custom_call.1} parent=1 // pred_check
      _
    $region23: #{tpu_custom_call.1} parent=1 // pred_check_branch
      %66 = sbr.rel (0) target = $region25
    $region24: #{tpu_custom_call.1} parent=1 // pred_region
      _
    $region25: #{tpu_custom_call.1} parent=1 // pred_fallthru
      _
    // Predicated region
    $region26: #{tpu_custom_call.1} parent=1 // pred_check
      _
    $region27: #{tpu_custom_call.1} parent=1 // pred_check_branch
      %68 = sbr.rel (0) target = $region29
    $region28: #{tpu_custom_call.1} parent=1 // pred_region
      %s70 = ssub.s32 3072, 3072
      %71 = vsyncadd [#allocation11], %s70
      %s72 = sshll.u32 [#allocation10], 4
      %s73 = int_to_ptr.vmem [resolvable:$true] %s72
      %78 = dma.hbm_to_vmem [thread:$0]  %s7, 3072, %s73, [#allocation11], 192, 192, 12
    $region29: #{tpu_custom_call.1} parent=1 // pred_fallthru
      _
    // Predicated region
    $region30: #{tpu_custom_call.1} parent=1 // pred_check
      _
    $region31: #{tpu_custom_call.1} parent=1 // pred_check_branch
      %80 = sbr.rel (0) target = $region33
    $region32: #{tpu_custom_call.1} parent=1 // pred_region
      _
    $region33: #{tpu_custom_call.1} parent=1 // pred_fallthru
      _
    // Predicated region
    $region34: #{tpu_custom_call.1} parent=1 // pred_check
      _
    $region35: #{tpu_custom_call.1} parent=1 // pred_check_branch
      %82 = sbr.rel (0) target = $region37
    $region36: #{tpu_custom_call.1} parent=1 // pred_region
      %s84 = ssub.s32 2048, 2048
      %85 = vsyncadd [#allocation11], %s84
      %s86 = sshll.u32 [#allocation12], 4
      %s87 = int_to_ptr.vmem [resolvable:$true] %s86
      %92 = dma.hbm_to_vmem [thread:$0]  %s9, 2048, %s87, [#allocation11], 128, 128, 8
    $region37: #{tpu_custom_call.1} parent=1 // pred_fallthru
      _
    // Predicated region
    $region38: #{tpu_custom_call.1} parent=1 // pred_check
      _
    $region39: #{tpu_custom_call.1} parent=1 // pred_check_branch
      %94 = sbr.rel (0) target = $region41
    $region40: #{tpu_custom_call.1} parent=1 // pred_region
      _
    $region41: #{tpu_custom_call.1} parent=1 // pred_fallthru
      _
    // Predicated region
    $region42: #{tpu_custom_call.1} parent=1 // pred_check
      _
    $region43: #{tpu_custom_call.1} parent=1 // pred_check_branch
      %96 = sbr.rel (0) target = $region45
    $region44: #{tpu_custom_call.1} parent=1 // pred_region
      %s98 = ssub.s32 1024, 1024
      %99 = vsyncadd [#allocation14], %s98
      %s100 = sshll.u32 [#allocation13], 4
      %s101 = int_to_ptr.vmem [resolvable:$true] %s100
      %106 = dma.hbm_to_vmem [thread:$0]  %s11, 1024, %s101, [#allocation14], 64, 64, 4
    $region45: #{tpu_custom_call.1} parent=1 // pred_fallthru
      _
    // Predicated region
    $region46: #{tpu_custom_call.1} parent=1 // pred_check
      _
    $region47: #{tpu_custom_call.1} parent=1 // pred_check_branch
      %108 = sbr.rel (0) target = $region49
    $region48: #{tpu_custom_call.1} parent=1 // pred_region
      _
    $region49: #{tpu_custom_call.1} parent=1 // pred_fallthru
      _
    // Predicated region
    $region50: #{tpu_custom_call.1} parent=1 // pred_check
      _
    $region51: #{tpu_custom_call.1} parent=1 // pred_check_branch
      %110 = sbr.rel (0) target = $region53
    $region52: #{tpu_custom_call.1} parent=1 // pred_region
      %111 = dma.done [#allocation5], 64
    $region53: #{tpu_custom_call.1} parent=1 // pred_fallthru
      _
    // Predicated region
    $region54: #{tpu_custom_call.1} parent=1 // pred_check
      _
    $region55: #{tpu_custom_call.1} parent=1 // pred_check_branch
      %113 = sbr.rel (0) target = $region57
    $region56: #{tpu_custom_call.1} parent=1 // pred_region
      %114 = dma.done [#allocation8], 2048
    $region57: #{tpu_custom_call.1} parent=1 // pred_fallthru
      _
    // Predicated region
    $region58: #{tpu_custom_call.1} parent=1 // pred_check
      _
    $region59: #{tpu_custom_call.1} parent=1 // pred_check_branch
      %116 = sbr.rel (0) target = $region61
    $region60: #{tpu_custom_call.1} parent=1 // pred_region
      %117 = dma.done [#allocation8], 2048
    $region61: #{tpu_custom_call.1} parent=1 // pred_fallthru
      _
    // Predicated region
    $region62: #{tpu_custom_call.1} parent=1 // pred_check
      _
    $region63: #{tpu_custom_call.1} parent=1 // pred_check_branch
      %119 = sbr.rel (0) target = $region65
    $region64: #{tpu_custom_call.1} parent=1 // pred_region
      %120 = dma.done [#allocation11], 3072
    $region65: #{tpu_custom_call.1} parent=1 // pred_fallthru
      _
    // Predicated region
    $region66: #{tpu_custom_call.1} parent=1 // pred_check
      _
    $region67: #{tpu_custom_call.1} parent=1 // pred_check_branch
      %122 = sbr.rel (0) target = $region69
    $region68: #{tpu_custom_call.1} parent=1 // pred_region
      %123 = dma.done [#allocation11], 2048
    $region69: #{tpu_custom_call.1} parent=1 // pred_fallthru
      _
    // Predicated region
    $region70: #{tpu_custom_call.1} parent=1 // pred_check
      _
    $region71: #{tpu_custom_call.1} parent=1 // pred_check_branch
      %125 = sbr.rel (0) target = $region73
    $region72: #{tpu_custom_call.1} parent=1 // pred_region
      %126 = dma.done [#allocation14], 1024
    $region73: #{tpu_custom_call.1} parent=1 // pred_fallthru
      _
    %s128 = sld [smem:[#allocation3]]
    %p129 = scmp.lt.s32.totalorder %s128, 0
    %s130 = ssub.s32 0, %s128
    %s131 = scalar_select %p129, %s130, %s128
    %s132 = sand.u32 %s131, 1
    %s133 = ssub.s32 0, %s132
    %s134 = scalar_select %p129, %s133, %s132
    %p135 = scmp.ne.s32.totalorder %s134, 0
    %p136 = scmp.lt.s32.totalorder %s134, 0
    %p137 = pnand %p136, %p135
    %p138 = pneg %p137
    %s139 = sadd.s32 %s134, 2
    %s140 = scalar_select %p138, %s139, %s134
    %p141 = scmp.eq.s32.totalorder %s140, 1
    %p142 = scmp.eq.s32.totalorder %s140, 0
    %v143 = vld [vmem:[#allocation4] sm:$0xf]
    %v144 = vld [vmem:[#allocation7] sm:$0xff]
    %v145 = vld [vmem:[#allocation7 + $0x8] sm:$0xff]
    %v146 = vld [vmem:[#allocation7 + $0x10] sm:$0xff]
    %v147 = vld [vmem:[#allocation7 + $0x18] sm:$0xff]
    %v148 = vld [vmem:[#allocation7 + $0x20] sm:$0xff]
    %v149 = vld [vmem:[#allocation7 + $0x28] sm:$0xff]
    %v150 = vld [vmem:[#allocation7 + $0x30] sm:$0xff]
    %v151 = vld [vmem:[#allocation7 + $0x38] sm:$0xff]
    %v152 = vld [vmem:[#allocation7 + $0x40] sm:$0xff]
    %v153 = vld [vmem:[#allocation7 + $0x48] sm:$0xff]
    %v154 = vld [vmem:[#allocation7 + $0x50] sm:$0xff]
    %v155 = vld [vmem:[#allocation7 + $0x58] sm:$0xff]
    %v156 = vld [vmem:[#allocation7 + $0x60] sm:$0xff]
    %v157 = vld [vmem:[#allocation7 + $0x68] sm:$0xff]
    %v158 = vld [vmem:[#allocation7 + $0x70] sm:$0xff]
    %v159 = vld [vmem:[#allocation7 + $0x78] sm:$0xff]
    %v160 = vld [vmem:[%s3] sm:$0x3]
    %v162 = vlaneseq
    %v163 = vshrl.u32 %v162, 7
    %v164 = vsub.s32 0, %v163
    %v165 = vrot.slane %v160, %v164
    %v166 = vlaneseq
    %v167 = vshrl.u32 %v166, 7
    %v168 = vsub.s32 1, %v167
    %v169 = vrot.slane %v160, %v168
    %v188 = vunpack.c.l.b16 %v144
    %v189 = vunpack.c.h.b16 %v144
    %v190 = vunpack.c.l.b16 %v145
    %v191 = vunpack.c.h.b16 %v145
    %v192 = vunpack.c.l.b16 %v146
    %v193 = vunpack.c.h.b16 %v146
    %v194 = vunpack.c.l.b16 %v147
    %v195 = vunpack.c.h.b16 %v147
    %v196 = vunpack.c.l.b16 %v148
    %v197 = vunpack.c.h.b16 %v148
    %v198 = vunpack.c.l.b16 %v149
    %v199 = vunpack.c.h.b16 %v149
    %v200 = vunpack.c.l.b16 %v150
    %v201 = vunpack.c.h.b16 %v150
    %v202 = vunpack.c.l.b16 %v151
    %v203 = vunpack.c.h.b16 %v151
    %v204 = vunpack.c.l.b16 %v152
    %v205 = vunpack.c.h.b16 %v152
    %v206 = vunpack.c.l.b16 %v153
    %v207 = vunpack.c.h.b16 %v153
    %v208 = vunpack.c.l.b16 %v154
    %v209 = vunpack.c.h.b16 %v154
    %v210 = vunpack.c.l.b16 %v155
    %v211 = vunpack.c.h.b16 %v155
    %v212 = vunpack.c.l.b16 %v156
    %v213 = vunpack.c.h.b16 %v156
    %v214 = vunpack.c.l.b16 %v157
    %v215 = vunpack.c.h.b16 %v157
    %v216 = vunpack.c.l.b16 %v158
    %v217 = vunpack.c.h.b16 %v158
    %v218 = vunpack.c.l.b16 %v159
    %v219 = vunpack.c.h.b16 %v159
    %v220 = vpack.c.b16 %v190, %v188
    %v221 = vpack.c.b16 %v191, %v189
    %v222 = vpack.c.b16 %v194, %v192
    %v223 = vpack.c.b16 %v195, %v193
    %v224 = vpack.c.b16 %v198, %v196
    %v225 = vpack.c.b16 %v199, %v197
    %v226 = vpack.c.b16 %v202, %v200
    %v227 = vpack.c.b16 %v203, %v201
    %v228 = vpack.c.b16 %v206, %v204
    %v229 = vpack.c.b16 %v207, %v205
    %v230 = vpack.c.b16 %v210, %v208
    %v231 = vpack.c.b16 %v211, %v209
    %v232 = vpack.c.b16 %v214, %v212
    %v233 = vpack.c.b16 %v215, %v213
    %v234 = vpack.c.b16 %v218, %v216
    %v235 = vpack.c.b16 %v219, %v217
    %252 = vmatprep.subr.bf16.mxu0 %v221
    %253 = vmatpush1.bf16.msra.mxu0 %v220
    %254 = vmatprep.subr.bf16.mxu0 %v223
    %255 = vmatpush1.bf16.msra.mxu0 %v222
    %256 = vmatprep.subr.bf16.mxu0 %v225
    %257 = vmatpush1.bf16.msra.mxu0 %v224
    %258 = vmatprep.subr.bf16.mxu0 %v227
    %259 = vmatpush1.bf16.msra.mxu0 %v226
    %260 = vmatprep.subr.bf16.mxu0 %v229
    %261 = vmatpush1.bf16.msra.mxu0 %v228
    %262 = vmatprep.subr.bf16.mxu0 %v231
    %263 = vmatpush1.bf16.msra.mxu0 %v230
    %264 = vmatprep.subr.bf16.mxu0 %v233
    %265 = vmatpush1.bf16.msra.mxu0 %v232
    %266 = vmatprep.subr.bf16.mxu0 %v235
    %267 = vmatpush1.bf16.msra.mxu0 %v234
    %268 = vmatprep.subr.bf16.mxu0 0
    %269 = vmatpush1.bf16.msra.mxu0 0
    %270 = vmatprep.subr.bf16.mxu0 0
    %271 = vmatpush1.bf16.msra.mxu0 0
    %272 = vmatprep.subr.bf16.mxu0 0
    %273 = vmatpush1.bf16.msra.mxu0 0
    %274 = vmatprep.subr.bf16.mxu0 0
    %275 = vmatpush1.bf16.msra.mxu0 0
    %276 = vmatprep.subr.bf16.mxu0 0
    %277 = vmatpush1.bf16.msra.mxu0 0
    %278 = vmatprep.subr.bf16.mxu0 0
    %279 = vmatpush1.bf16.msra.mxu0 0
    %280 = vmatprep.subr.bf16.mxu0 0
    %281 = vmatpush1.bf16.msra.mxu0 0
    %282 = vmatprep.subr.bf16.mxu0 0
    %283 = vmatpush1.bf16.msra.mxu0 0
    %284 = vmatprep.mubr.bf16.mxu0 0
    %285 = vmatmul.mubr.bf16.gmra.mrb[0].mxu0 %v143
    %v286 = vpop.f32.mrb[0].mxu0
    %v287 = vadd.f32 %v165, %v286
    %v288 = vpop.f32.mrb[0].mxu0
    %v289 = vadd.f32 %v169, %v288
    %v290 = vpop.f32.mrb[0].mxu0
    %v291 = vpop.f32.mrb[0].mxu0
    %292 = vdwg.mxu0
    %v293 = vxor.u32 %v287, 2147483648
    %v294 = vmul.f32 %v293, 1.442695
    %v295 = vpow.pop %v294
    %v296 = vadd.f32 %v295, 1.0
    %v297 = vrcp.pop %v296
    %v298 = vmul.f32 1.0, %v297
    %v299 = vld [vmem:[%s4] sm:$0x1]
    %v301 = vlaneseq
    %v302 = vshrl.u32 %v301, 7
    %v303 = vsub.s32 0, %v302
    %v304 = vrot.slane %v299, %v303
    %v306 = vmul.f32 %v298, %v304
    %307 = vst [vmem:[#allocation15 + $0x8] sm:$0xff] %v306
    %v308 = vmax.f32 %v289, 0.0
    %v309 = vpack.c.bf16 %v308, %v308
    %310 = vst [vmem:[#allocation16] sm:$0xf] %v309
    %v311 = vld [vmem:[#allocation16] sm:$0xf]
    %v312 = vld [vmem:[#allocation9] sm:$0xff]
    %v313 = vld [vmem:[#allocation9 + $0x8] sm:$0xff]
    %v314 = vld [vmem:[#allocation9 + $0x10] sm:$0xff]
    %v315 = vld [vmem:[#allocation9 + $0x18] sm:$0xff]
    %v316 = vld [vmem:[#allocation9 + $0x20] sm:$0xff]
    %v317 = vld [vmem:[#allocation9 + $0x28] sm:$0xff]
    %v318 = vld [vmem:[#allocation9 + $0x30] sm:$0xff]
    %v319 = vld [vmem:[#allocation9 + $0x38] sm:$0xff]
    %v320 = vld [vmem:[#allocation9 + $0x40] sm:$0xff]
    %v321 = vld [vmem:[#allocation9 + $0x48] sm:$0xff]
    %v322 = vld [vmem:[#allocation9 + $0x50] sm:$0xff]
    %v323 = vld [vmem:[#allocation9 + $0x58] sm:$0xff]
    %v324 = vld [vmem:[#allocation9 + $0x60] sm:$0xff]
    %v325 = vld [vmem:[#allocation9 + $0x68] sm:$0xff]
    %v326 = vld [vmem:[#allocation9 + $0x70] sm:$0xff]
    %v327 = vld [vmem:[#allocation9 + $0x78] sm:$0xff]
    %v328 = vld [vmem:[%s6] sm:$0x3]
    %v330 = vlaneseq
    %v331 = vshrl.u32 %v330, 7
    %v332 = vsub.s32 0, %v331
    %v333 = vrot.slane %v328, %v332
    %v334 = vlaneseq
    %v335 = vshrl.u32 %v334, 7
    %v336 = vsub.s32 1, %v335
    %v337 = vrot.slane %v328, %v336
    %v356 = vunpack.c.l.b16 %v312
    %v357 = vunpack.c.h.b16 %v312
    %v358 = vunpack.c.l.b16 %v313
    %v359 = vunpack.c.h.b16 %v313
    %v360 = vunpack.c.l.b16 %v314
    %v361 = vunpack.c.h.b16 %v314
    %v362 = vunpack.c.l.b16 %v315
    %v363 = vunpack.c.h.b16 %v315
    %v364 = vunpack.c.l.b16 %v316
    %v365 = vunpack.c.h.b16 %v316
    %v366 = vunpack.c.l.b16 %v317
    %v367 = vunpack.c.h.b16 %v317
    %v368 = vunpack.c.l.b16 %v318
    %v369 = vunpack.c.h.b16 %v318
    %v370 = vunpack.c.l.b16 %v319
    %v371 = vunpack.c.h.b16 %v319
    %v372 = vunpack.c.l.b16 %v320
    %v373 = vunpack.c.h.b16 %v320
    %v374 = vunpack.c.l.b16 %v321
    %v375 = vunpack.c.h.b16 %v321
    %v376 = vunpack.c.l.b16 %v322
    %v377 = vunpack.c.h.b16 %v322
    %v378 = vunpack.c.l.b16 %v323
    %v379 = vunpack.c.h.b16 %v323
    %v380 = vunpack.c.l.b16 %v324
    %v381 = vunpack.c.h.b16 %v324
    %v382 = vunpack.c.l.b16 %v325
    %v383 = vunpack.c.h.b16 %v325
    %v384 = vunpack.c.l.b16 %v326
    %v385 = vunpack.c.h.b16 %v326
    %v386 = vunpack.c.l.b16 %v327
    %v387 = vunpack.c.h.b16 %v327
    %v388 = vpack.c.b16 %v358, %v356
    %v389 = vpack.c.b16 %v359, %v357
    %v390 = vpack.c.b16 %v362, %v360
    %v391 = vpack.c.b16 %v363, %v361
    %v392 = vpack.c.b16 %v366, %v364
    %v393 = vpack.c.b16 %v367, %v365
    %v394 = vpack.c.b16 %v370, %v368
    %v395 = vpack.c.b16 %v371, %v369
    %v396 = vpack.c.b16 %v374, %v372
    %v397 = vpack.c.b16 %v375, %v373
    %v398 = vpack.c.b16 %v378, %v376
    %v399 = vpack.c.b16 %v379, %v377
    %v400 = vpack.c.b16 %v382, %v380
    %v401 = vpack.c.b16 %v383, %v381
    %v402 = vpack.c.b16 %v386, %v384
    %v403 = vpack.c.b16 %v387, %v385
    %420 = vmatprep.subr.bf16.mxu0 %v389
    %421 = vmatpush1.bf16.msra.mxu0 %v388
    %422 = vmatprep.subr.bf16.mxu0 %v391
    %423 = vmatpush1.bf16.msra.mxu0 %v390
    %424 = vmatprep.subr.bf16.mxu0 %v393
    %425 = vmatpush1.bf16.msra.mxu0 %v392
    %426 = vmatprep.subr.bf16.mxu0 %v395
    %427 = vmatpush1.bf16.msra.mxu0 %v394
    %428 = vmatprep.subr.bf16.mxu0 %v397
    %429 = vmatpush1.bf16.msra.mxu0 %v396
    %430 = vmatprep.subr.bf16.mxu0 %v399
    %431 = vmatpush1.bf16.msra.mxu0 %v398
    %432 = vmatprep.subr.bf16.mxu0 %v401
    %433 = vmatpush1.bf16.msra.mxu0 %v400
    %434 = vmatprep.subr.bf16.mxu0 %v403
    %435 = vmatpush1.bf16.msra.mxu0 %v402
    %436 = vmatprep.subr.bf16.mxu0 0
    %437 = vmatpush1.bf16.msra.mxu0 0
    %438 = vmatprep.subr.bf16.mxu0 0
    %439 = vmatpush1.bf16.msra.mxu0 0
    %440 = vmatprep.subr.bf16.mxu0 0
    %441 = vmatpush1.bf16.msra.mxu0 0
    %442 = vmatprep.subr.bf16.mxu0 0
    %443 = vmatpush1.bf16.msra.mxu0 0
    %444 = vmatprep.subr.bf16.mxu0 0
    %445 = vmatpush1.bf16.msra.mxu0 0
    %446 = vmatprep.subr.bf16.mxu0 0
    %447 = vmatpush1.bf16.msra.mxu0 0
    %448 = vmatprep.subr.bf16.mxu0 0
    %449 = vmatpush1.bf16.msra.mxu0 0
    %450 = vmatprep.subr.bf16.mxu0 0
    %451 = vmatpush1.bf16.msra.mxu0 0
    %452 = vmatprep.mubr.bf16.mxu0 0
    %453 = vmatmul.mubr.bf16.gmra.mrb[0].mxu0 %v311
    %v454 = vpop.f32.mrb[0].mxu0
    %v455 = vadd.f32 %v333, %v454
    %v456 = vpop.f32.mrb[0].mxu0
    %v457 = vadd.f32 %v337, %v456
    %v458 = vpop.f32.mrb[0].mxu0
    %v459 = vpop.f32.mrb[0].mxu0
    %460 = vdwg.mxu0
    %v461 = vmax.f32 %v455, 0.0
    %v462 = vpack.c.bf16 %v461, %v461
    %463 = vst [vmem:[#allocation16 + $0x4] sm:$0xf] %v462
    %v464 = vld [vmem:[#allocation16 + $0x4] sm:$0xf]
    %v465 = vld [vmem:[#allocation10] sm:$0xff]
    %v466 = vld [vmem:[#allocation10 + $0x8] sm:$0xf]
    %v467 = vld [vmem:[#allocation10 + $0xc] sm:$0xff]
    %v468 = vld [vmem:[#allocation10 + $0x14] sm:$0xf]
    %v469 = vld [vmem:[#allocation10 + $0x18] sm:$0xff]
    %v470 = vld [vmem:[#allocation10 + $0x20] sm:$0xf]
    %v471 = vld [vmem:[#allocation10 + $0x24] sm:$0xff]
    %v472 = vld [vmem:[#allocation10 + $0x2c] sm:$0xf]
    %v473 = vld [vmem:[#allocation10 + $0x30] sm:$0xff]
    %v474 = vld [vmem:[#allocation10 + $0x38] sm:$0xf]
    %v475 = vld [vmem:[#allocation10 + $0x3c] sm:$0xff]
    %v476 = vld [vmem:[#allocation10 + $0x44] sm:$0xf]
    %v477 = vld [vmem:[#allocation10 + $0x48] sm:$0xff]
    %v478 = vld [vmem:[#allocation10 + $0x50] sm:$0xf]
    %v479 = vld [vmem:[#allocation10 + $0x54] sm:$0xff]
    %v480 = vld [vmem:[#allocation10 + $0x5c] sm:$0xf]
    %v481 = vld [vmem:[#allocation10 + $0x60] sm:$0xff]
    %v482 = vld [vmem:[#allocation10 + $0x68] sm:$0xf]
    %v483 = vld [vmem:[#allocation10 + $0x6c] sm:$0xff]
    %v484 = vld [vmem:[#allocation10 + $0x74] sm:$0xf]
    %v485 = vld [vmem:[#allocation10 + $0x78] sm:$0xff]
    %v486 = vld [vmem:[#allocation10 + $0x80] sm:$0xf]
    %v487 = vld [vmem:[#allocation10 + $0x84] sm:$0xff]
    %v488 = vld [vmem:[#allocation10 + $0x8c] sm:$0xf]
    %v489 = vld [vmem:[#allocation10 + $0x90] sm:$0xff]
    %v490 = vld [vmem:[#allocation10 + $0x98] sm:$0xf]
    %v491 = vld [vmem:[#allocation10 + $0x9c] sm:$0xff]
    %v492 = vld [vmem:[#allocation10 + $0xa4] sm:$0xf]
    %v493 = vld [vmem:[#allocation10 + $0xa8] sm:$0xff]
    %v494 = vld [vmem:[#allocation10 + $0xb0] sm:$0xf]
    %v495 = vld [vmem:[#allocation10 + $0xb4] sm:$0xff]
    %v496 = vld [vmem:[#allocation10 + $0xbc] sm:$0xf]
    %v497 = vld [vmem:[%s8] sm:$0x7]
    %v499 = vlaneseq
    %v500 = vshrl.u32 %v499, 7
    %v501 = vsub.s32 0, %v500
    %v502 = vrot.slane %v497, %v501
    %v503 = vlaneseq
    %v504 = vshrl.u32 %v503, 7
    %v505 = vsub.s32 1, %v504
    %v506 = vrot.slane %v497, %v505
    %v507 = vlaneseq
    %v508 = vshrl.u32 %v507, 7
    %v509 = vsub.s32 2, %v508
    %v510 = vrot.slane %v497, %v509
    %v546 = vunpack.c.l.b16 %v465
    %v547 = vunpack.c.h.b16 %v465
    %v548 = vunpack.c.l.b16 %v466
    %v549 = vunpack.c.l.b16 %v467
    %v550 = vunpack.c.h.b16 %v467
    %v551 = vunpack.c.l.b16 %v468
    %v552 = vunpack.c.l.b16 %v469
    %v553 = vunpack.c.h.b16 %v469
    %v554 = vunpack.c.l.b16 %v470
    %v555 = vunpack.c.l.b16 %v471
    %v556 = vunpack.c.h.b16 %v471
    %v557 = vunpack.c.l.b16 %v472
    %v558 = vunpack.c.l.b16 %v473
    %v559 = vunpack.c.h.b16 %v473
    %v560 = vunpack.c.l.b16 %v474
    %v561 = vunpack.c.l.b16 %v475
    %v562 = vunpack.c.h.b16 %v475
    %v563 = vunpack.c.l.b16 %v476
    %v564 = vunpack.c.l.b16 %v477
    %v565 = vunpack.c.h.b16 %v477
    %v566 = vunpack.c.l.b16 %v478
    %v567 = vunpack.c.l.b16 %v479
    %v568 = vunpack.c.h.b16 %v479
    %v569 = vunpack.c.l.b16 %v480
    %v570 = vunpack.c.l.b16 %v481
    %v571 = vunpack.c.h.b16 %v481
    %v572 = vunpack.c.l.b16 %v482
    %v573 = vunpack.c.l.b16 %v483
    %v574 = vunpack.c.h.b16 %v483
    %v575 = vunpack.c.l.b16 %v484
    %v576 = vunpack.c.l.b16 %v485
    %v577 = vunpack.c.h.b16 %v485
    %v578 = vunpack.c.l.b16 %v486
    %v579 = vunpack.c.l.b16 %v487
    %v580 = vunpack.c.h.b16 %v487
    %v581 = vunpack.c.l.b16 %v488
    %v582 = vunpack.c.l.b16 %v489
    %v583 = vunpack.c.h.b16 %v489
    %v584 = vunpack.c.l.b16 %v490
    %v585 = vunpack.c.l.b16 %v491
    %v586 = vunpack.c.h.b16 %v491
    %v587 = vunpack.c.l.b16 %v492
    %v588 = vunpack.c.l.b16 %v493
    %v589 = vunpack.c.h.b16 %v493
    %v590 = vunpack.c.l.b16 %v494
    %v591 = vunpack.c.l.b16 %v495
    %v592 = vunpack.c.h.b16 %v495
    %v593 = vunpack.c.l.b16 %v496
    %v594 = vpack.c.b16 %v549, %v546
    %v595 = vpack.c.b16 %v550, %v547
    %v596 = vpack.c.b16 %v551, %v548
    %v597 = vpack.c.b16 %v555, %v552
    %v598 = vpack.c.b16 %v556, %v553
    %v599 = vpack.c.b16 %v557, %v554
    %v600 = vpack.c.b16 %v561, %v558
    %v601 = vpack.c.b16 %v562, %v559
    %v602 = vpack.c.b16 %v563, %v560
    %v603 = vpack.c.b16 %v567, %v564
    %v604 = vpack.c.b16 %v568, %v565
    %v605 = vpack.c.b16 %v569, %v566
    %v606 = vpack.c.b16 %v573, %v570
    %v607 = vpack.c.b16 %v574, %v571
    %v608 = vpack.c.b16 %v575, %v572
    %v609 = vpack.c.b16 %v579, %v576
    %v610 = vpack.c.b16 %v580, %v577
    %v611 = vpack.c.b16 %v581, %v578
    %v612 = vpack.c.b16 %v585, %v582
    %v613 = vpack.c.b16 %v586, %v583
    %v614 = vpack.c.b16 %v587, %v584
    %v615 = vpack.c.b16 %v591, %v588
    %v616 = vpack.c.b16 %v592, %v589
    %v617 = vpack.c.b16 %v593, %v590
    %642 = vmatprep.subr.bf16.mxu0 %v595
    %643 = vmatpush1.bf16.msra.mxu0 %v594
    %644 = vmatprep.subr.bf16.mxu0 %v598
    %645 = vmatpush1.bf16.msra.mxu0 %v597
    %646 = vmatprep.subr.bf16.mxu0 %v601
    %647 = vmatpush1.bf16.msra.mxu0 %v600
    %648 = vmatprep.subr.bf16.mxu0 %v604
    %649 = vmatpush1.bf16.msra.mxu0 %v603
    %650 = vmatprep.subr.bf16.mxu0 %v607
    %651 = vmatpush1.bf16.msra.mxu0 %v606
    %652 = vmatprep.subr.bf16.mxu0 %v610
    %653 = vmatpush1.bf16.msra.mxu0 %v609
    %654 = vmatprep.subr.bf16.mxu0 %v613
    %655 = vmatpush1.bf16.msra.mxu0 %v612
    %656 = vmatprep.subr.bf16.mxu0 %v616
    %657 = vmatpush1.bf16.msra.mxu0 %v615
    %658 = vmatprep.subr.bf16.mxu0 0
    %659 = vmatpush1.bf16.msra.mxu0 0
    %660 = vmatprep.subr.bf16.mxu0 0
    %661 = vmatpush1.bf16.msra.mxu0 0
    %662 = vmatprep.subr.bf16.mxu0 0
    %663 = vmatpush1.bf16.msra.mxu0 0
    %664 = vmatprep.subr.bf16.mxu0 0
    %665 = vmatpush1.bf16.msra.mxu0 0
    %666 = vmatprep.subr.bf16.mxu0 0
    %667 = vmatpush1.bf16.msra.mxu0 0
    %668 = vmatprep.subr.bf16.mxu0 0
    %669 = vmatpush1.bf16.msra.mxu0 0
    %670 = vmatprep.subr.bf16.mxu0 0
    %671 = vmatpush1.bf16.msra.mxu0 0
    %672 = vmatprep.subr.bf16.mxu0 0
    %673 = vmatpush1.bf16.msra.mxu0 0
    %674 = vmatprep.mubr.bf16.mxu0 0
    %675 = vmatmul.mubr.bf16.gmra.mrb[0].mxu0 %v464
    %v676 = vpop.f32.mrb[0].mxu0
    %v677 = vadd.f32 %v502, %v676
    %v678 = vpop.f32.mrb[0].mxu0
    %v679 = vadd.f32 %v506, %v678
    %v680 = vpop.f32.mrb[0].mxu0
    %v681 = vpop.f32.mrb[0].mxu0
    %682 = vdwg.mxu0
    %683 = vmatprep.subr.bf16.mxu0 0
    %684 = vmatpush1.bf16.msra.mxu0 %v596
    %685 = vmatprep.subr.bf16.mxu0 0
    %686 = vmatpush1.bf16.msra.mxu0 %v599
    %687 = vmatprep.subr.bf16.mxu0 0
    %688 = vmatpush1.bf16.msra.mxu0 %v602
    %689 = vmatprep.subr.bf16.mxu0 0
    %690 = vmatpush1.bf16.msra.mxu0 %v605
    %691 = vmatprep.subr.bf16.mxu0 0
    %692 = vmatpush1.bf16.msra.mxu0 %v608
    %693 = vmatprep.subr.bf16.mxu0 0
    %694 = vmatpush1.bf16.msra.mxu0 %v611
    %695 = vmatprep.subr.bf16.mxu0 0
    %696 = vmatpush1.bf16.msra.mxu0 %v614
    %697 = vmatprep.subr.bf16.mxu0 0
    %698 = vmatpush1.bf16.msra.mxu0 %v617
    %699 = vmatprep.subr.bf16.mxu0 0
    %700 = vmatpush1.bf16.msra.mxu0 0
    %701 = vmatprep.subr.bf16.mxu0 0
    %702 = vmatpush1.bf16.msra.mxu0 0
    %703 = vmatprep.subr.bf16.mxu0 0
    %704 = vmatpush1.bf16.msra.mxu0 0
    %705 = vmatprep.subr.bf16.mxu0 0
    %706 = vmatpush1.bf16.msra.mxu0 0
    %707 = vmatprep.subr.bf16.mxu0 0
    %708 = vmatpush1.bf16.msra.mxu0 0
    %709 = vmatprep.subr.bf16.mxu0 0
    %710 = vmatpush1.bf16.msra.mxu0 0
    %711 = vmatprep.subr.bf16.mxu0 0
    %712 = vmatpush1.bf16.msra.mxu0 0
    %713 = vmatprep.subr.bf16.mxu0 0
    %714 = vmatpush1.bf16.msra.mxu0 0
    %715 = vmatprep.mubr.bf16.mxu0 0
    %716 = vmatmul.mubr.bf16.gmra.mrb[0].mxu0 %v464
    %v717 = vpop.f32.mrb[0].mxu0
    %v718 = vadd.f32 %v510, %v717
    %v719 = vpop.f32.mrb[0].mxu0
    %v720 = vpop.f32.mrb[0].mxu0
    %v721 = vpop.f32.mrb[0].mxu0
    %722 = vdwg.mxu0
    // Predicated region
    $region74: #{tpu_custom_call.1} parent=1 // pred_check
      %p723 = pneg %p142
    $region75: #{tpu_custom_call.1} parent=1 // pred_check_branch
      %725 = sbr.rel (%p723) target = $region77
    $region76: #{tpu_custom_call.1} parent=1 // pred_region
      %v726 = vmax.f32 %v677, 0.0
      %v727 = vpack.c.bf16 %v726, %v726
      %728 = vst [vmem:[#allocation16 + $0x8] sm:$0xf] %v727
    $region77: #{tpu_custom_call.1} parent=1 // pred_fallthru
      _
    // Predicated region
    $region78: #{tpu_custom_call.1} parent=1 // pred_check
      %p729 = pneg %p141
    $region79: #{tpu_custom_call.1} parent=1 // pred_check_branch
      %731 = sbr.rel (%p729) target = $region81
    $region80: #{tpu_custom_call.1} parent=1 // pred_region
      %v732 = vxor.u32 %v679, 2147483648
      %v733 = vmul.f32 %v732, 1.442695
      %v734 = vpow.pop %v733
      %v735 = vadd.f32 %v734, 1.0
      %v736 = vrcp.pop %v735
      %v737 = vmul.f32 1.0, %v736
      %v738 = vmul.f32 %v737, %v457
      %v739 = vadd.f32 %v677, %v738
      %v740 = vmax.f32 %v739, 0.0
      %v741 = vpack.c.bf16 %v740, %v740
      %742 = vst [vmem:[#allocation16 + $0x8] sm:$0xf] %v741
    $region81: #{tpu_custom_call.1} parent=1 // pred_fallthru
      _
    %v743 = vld [vmem:[#allocation16 + $0x8] sm:$0xf]
    %v744 = vld [vmem:[#allocation12] sm:$0xff]
    %v745 = vld [vmem:[#allocation12 + $0x8] sm:$0xff]
    %v746 = vld [vmem:[#allocation12 + $0x10] sm:$0xff]
    %v747 = vld [vmem:[#allocation12 + $0x18] sm:$0xff]
    %v748 = vld [vmem:[#allocation12 + $0x20] sm:$0xff]
    %v749 = vld [vmem:[#allocation12 + $0x28] sm:$0xff]
    %v750 = vld [vmem:[#allocation12 + $0x30] sm:$0xff]
    %v751 = vld [vmem:[#allocation12 + $0x38] sm:$0xff]
    %v752 = vld [vmem:[#allocation12 + $0x40] sm:$0xff]
    %v753 = vld [vmem:[#allocation12 + $0x48] sm:$0xff]
    %v754 = vld [vmem:[#allocation12 + $0x50] sm:$0xff]
    %v755 = vld [vmem:[#allocation12 + $0x58] sm:$0xff]
    %v756 = vld [vmem:[#allocation12 + $0x60] sm:$0xff]
    %v757 = vld [vmem:[#allocation12 + $0x68] sm:$0xff]
    %v758 = vld [vmem:[#allocation12 + $0x70] sm:$0xff]
    %v759 = vld [vmem:[#allocation12 + $0x78] sm:$0xff]
    %v760 = vld [vmem:[%s10] sm:$0x3]
    %v762 = vlaneseq
    %v763 = vshrl.u32 %v762, 7
    %v764 = vsub.s32 0, %v763
    %v765 = vrot.slane %v760, %v764
    %v766 = vlaneseq
    %v767 = vshrl.u32 %v766, 7
    %v768 = vsub.s32 1, %v767
    %v769 = vrot.slane %v760, %v768
    %v788 = vunpack.c.l.b16 %v744
    %v789 = vunpack.c.h.b16 %v744
    %v790 = vunpack.c.l.b16 %v745
    %v791 = vunpack.c.h.b16 %v745
    %v792 = vunpack.c.l.b16 %v746
    %v793 = vunpack.c.h.b16 %v746
    %v794 = vunpack.c.l.b16 %v747
    %v795 = vunpack.c.h.b16 %v747
    %v796 = vunpack.c.l.b16 %v748
    %v797 = vunpack.c.h.b16 %v748
    %v798 = vunpack.c.l.b16 %v749
    %v799 = vunpack.c.h.b16 %v749
    %v800 = vunpack.c.l.b16 %v750
    %v801 = vunpack.c.h.b16 %v750
    %v802 = vunpack.c.l.b16 %v751
    %v803 = vunpack.c.h.b16 %v751
    %v804 = vunpack.c.l.b16 %v752
    %v805 = vunpack.c.h.b16 %v752
    %v806 = vunpack.c.l.b16 %v753
    %v807 = vunpack.c.h.b16 %v753
    %v808 = vunpack.c.l.b16 %v754
    %v809 = vunpack.c.h.b16 %v754
    %v810 = vunpack.c.l.b16 %v755
    %v811 = vunpack.c.h.b16 %v755
    %v812 = vunpack.c.l.b16 %v756
    %v813 = vunpack.c.h.b16 %v756
    %v814 = vunpack.c.l.b16 %v757
    %v815 = vunpack.c.h.b16 %v757
    %v816 = vunpack.c.l.b16 %v758
    %v817 = vunpack.c.h.b16 %v758
    %v818 = vunpack.c.l.b16 %v759
    %v819 = vunpack.c.h.b16 %v759
    %v820 = vpack.c.b16 %v790, %v788
    %v821 = vpack.c.b16 %v791, %v789
    %v822 = vpack.c.b16 %v794, %v792
    %v823 = vpack.c.b16 %v795, %v793
    %v824 = vpack.c.b16 %v798, %v796
    %v825 = vpack.c.b16 %v799, %v797
    %v826 = vpack.c.b16 %v802, %v800
    %v827 = vpack.c.b16 %v803, %v801
    %v828 = vpack.c.b16 %v806, %v804
    %v829 = vpack.c.b16 %v807, %v805
    %v830 = vpack.c.b16 %v810, %v808
    %v831 = vpack.c.b16 %v811, %v809
    %v832 = vpack.c.b16 %v814, %v812
    %v833 = vpack.c.b16 %v815, %v813
    %v834 = vpack.c.b16 %v818, %v816
    %v835 = vpack.c.b16 %v819, %v817
    %852 = vmatprep.subr.bf16.mxu0 %v821
    %853 = vmatpush1.bf16.msra.mxu0 %v820
    %854 = vmatprep.subr.bf16.mxu0 %v823
    %855 = vmatpush1.bf16.msra.mxu0 %v822
    %856 = vmatprep.subr.bf16.mxu0 %v825
    %857 = vmatpush1.bf16.msra.mxu0 %v824
    %858 = vmatprep.subr.bf16.mxu0 %v827
    %859 = vmatpush1.bf16.msra.mxu0 %v826
    %860 = vmatprep.subr.bf16.mxu0 %v829
    %861 = vmatpush1.bf16.msra.mxu0 %v828
    %862 = vmatprep.subr.bf16.mxu0 %v831
    %863 = vmatpush1.bf16.msra.mxu0 %v830
    %864 = vmatprep.subr.bf16.mxu0 %v833
    %865 = vmatpush1.bf16.msra.mxu0 %v832
    %866 = vmatprep.subr.bf16.mxu0 %v835
    %867 = vmatpush1.bf16.msra.mxu0 %v834
    %868 = vmatprep.subr.bf16.mxu0 0
    %869 = vmatpush1.bf16.msra.mxu0 0
    %870 = vmatprep.subr.bf16.mxu0 0
    %871 = vmatpush1.bf16.msra.mxu0 0
    %872 = vmatprep.subr.bf16.mxu0 0
    %873 = vmatpush1.bf16.msra.mxu0 0
    %874 = vmatprep.subr.bf16.mxu0 0
    %875 = vmatpush1.bf16.msra.mxu0 0
    %876 = vmatprep.subr.bf16.mxu0 0
    %877 = vmatpush1.bf16.msra.mxu0 0
    %878 = vmatprep.subr.bf16.mxu0 0
    %879 = vmatpush1.bf16.msra.mxu0 0
    %880 = vmatprep.subr.bf16.mxu0 0
    %881 = vmatpush1.bf16.msra.mxu0 0
    %882 = vmatprep.subr.bf16.mxu0 0
    %883 = vmatpush1.bf16.msra.mxu0 0
    %884 = vmatprep.mubr.bf16.mxu0 0
    %885 = vmatmul.mubr.bf16.gmra.mrb[0].mxu0 %v743
    %v886 = vpop.f32.mrb[0].mxu0
    %v887 = vadd.f32 %v765, %v886
    %v888 = vpop.f32.mrb[0].mxu0
    %v889 = vadd.f32 %v769, %v888
    %v890 = vpop.f32.mrb[0].mxu0
    %v891 = vpop.f32.mrb[0].mxu0
    %892 = vdwg.mxu0
    // Predicated region
    $region82: #{tpu_custom_call.1} parent=1 // pred_check
      %p893 = pneg %p142
    $region83: #{tpu_custom_call.1} parent=1 // pred_check_branch
      %895 = sbr.rel (%p893) target = $region85
    $region84: #{tpu_custom_call.1} parent=1 // pred_region
      %v896 = vmax.f32 %v887, 0.0
      %v897 = vpack.c.bf16 %v896, %v896
      %898 = vst [vmem:[#allocation16 + $0xc] sm:$0xf] %v897
    $region85: #{tpu_custom_call.1} parent=1 // pred_fallthru
      _
    // Predicated region
    $region86: #{tpu_custom_call.1} parent=1 // pred_check
      %p899 = pneg %p141
    $region87: #{tpu_custom_call.1} parent=1 // pred_check_branch
      %901 = sbr.rel (%p899) target = $region89
    $region88: #{tpu_custom_call.1} parent=1 // pred_region
      %v902 = vxor.u32 %v889, 2147483648
      %v903 = vmul.f32 %v902, 1.442695
      %v904 = vpow.pop %v903
      %v905 = vadd.f32 %v904, 1.0
      %v906 = vrcp.pop %v905
      %v907 = vmul.f32 1.0, %v906
      %v908 = vmul.f32 %v907, %v718
      %v909 = vadd.f32 %v887, %v908
      %v910 = vmax.f32 %v909, 0.0
      %v911 = vpack.c.bf16 %v910, %v910
      %912 = vst [vmem:[#allocation16 + $0xc] sm:$0xf] %v911
    $region89: #{tpu_custom_call.1} parent=1 // pred_fallthru
      _
    %v913 = vld [vmem:[#allocation16 + $0xc] sm:$0xf]
    %v914 = vld [vmem:[#allocation13] sm:$0xf]
    %v915 = vld [vmem:[#allocation13 + $0x4] sm:$0xf]
    %v916 = vld [vmem:[#allocation13 + $0x8] sm:$0xf]
    %v917 = vld [vmem:[#allocation13 + $0xc] sm:$0xf]
    %v918 = vld [vmem:[#allocation13 + $0x10] sm:$0xf]
    %v919 = vld [vmem:[#allocation13 + $0x14] sm:$0xf]
    %v920 = vld [vmem:[#allocation13 + $0x18] sm:$0xf]
    %v921 = vld [vmem:[#allocation13 + $0x1c] sm:$0xf]
    %v922 = vld [vmem:[#allocation13 + $0x20] sm:$0xf]
    %v923 = vld [vmem:[#allocation13 + $0x24] sm:$0xf]
    %v924 = vld [vmem:[#allocation13 + $0x28] sm:$0xf]
    %v925 = vld [vmem:[#allocation13 + $0x2c] sm:$0xf]
    %v926 = vld [vmem:[#allocation13 + $0x30] sm:$0xf]
    %v927 = vld [vmem:[#allocation13 + $0x34] sm:$0xf]
    %v928 = vld [vmem:[#allocation13 + $0x38] sm:$0xf]
    %v929 = vld [vmem:[#allocation13 + $0x3c] sm:$0xf]
    %v930 = vld [vmem:[%s12] sm:$0x1]
    %v932 = vlaneseq
    %v933 = vshrl.u32 %v932, 7
    %v934 = vsub.s32 0, %v933
    %v935 = vrot.slane %v930, %v934
    %v953 = vunpack.c.l.b16 %v914
    %v954 = vunpack.c.l.b16 %v915
    %v955 = vunpack.c.l.b16 %v916
    %v956 = vunpack.c.l.b16 %v917
    %v957 = vunpack.c.l.b16 %v918
    %v958 = vunpack.c.l.b16 %v919
    %v959 = vunpack.c.l.b16 %v920
    %v960 = vunpack.c.l.b16 %v921
    %v961 = vunpack.c.l.b16 %v922
    %v962 = vunpack.c.l.b16 %v923
    %v963 = vunpack.c.l.b16 %v924
    %v964 = vunpack.c.l.b16 %v925
    %v965 = vunpack.c.l.b16 %v926
    %v966 = vunpack.c.l.b16 %v927
    %v967 = vunpack.c.l.b16 %v928
    %v968 = vunpack.c.l.b16 %v929
    %v969 = vpack.c.b16 %v954, %v953
    %v970 = vpack.c.b16 %v956, %v955
    %v971 = vpack.c.b16 %v958, %v957
    %v972 = vpack.c.b16 %v960, %v959
    %v973 = vpack.c.b16 %v962, %v961
    %v974 = vpack.c.b16 %v964, %v963
    %v975 = vpack.c.b16 %v966, %v965
    %v976 = vpack.c.b16 %v968, %v967
    %985 = vmatprep.subr.bf16.mxu0 0
    %986 = vmatpush1.bf16.msra.mxu0 %v969
    %987 = vmatprep.subr.bf16.mxu0 0
    %988 = vmatpush1.bf16.msra.mxu0 %v970
    %989 = vmatprep.subr.bf16.mxu0 0
    %990 = vmatpush1.bf16.msra.mxu0 %v971
    %991 = vmatprep.subr.bf16.mxu0 0
    %992 = vmatpush1.bf16.msra.mxu0 %v972
    %993 = vmatprep.subr.bf16.mxu0 0
    %994 = vmatpush1.bf16.msra.mxu0 %v973
    %995 = vmatprep.subr.bf16.mxu0 0
    %996 = vmatpush1.bf16.msra.mxu0 %v974
    %997 = vmatprep.subr.bf16.mxu0 0
    %998 = vmatpush1.bf16.msra.mxu0 %v975
    %999 = vmatprep.subr.bf16.mxu0 0
    %1000 = vmatpush1.bf16.msra.mxu0 %v976
    %1001 = vmatprep.subr.bf16.mxu0 0
    %1002 = vmatpush1.bf16.msra.mxu0 0
    %1003 = vmatprep.subr.bf16.mxu0 0
    %1004 = vmatpush1.bf16.msra.mxu0 0
    %1005 = vmatprep.subr.bf16.mxu0 0
    %1006 = vmatpush1.bf16.msra.mxu0 0
    %1007 = vmatprep.subr.bf16.mxu0 0
    %1008 = vmatpush1.bf16.msra.mxu0 0
    %1009 = vmatprep.subr.bf16.mxu0 0
    %1010 = vmatpush1.bf16.msra.mxu0 0
    %1011 = vmatprep.subr.bf16.mxu0 0
    %1012 = vmatpush1.bf16.msra.mxu0 0
    %1013 = vmatprep.subr.bf16.mxu0 0
    %1014 = vmatpush1.bf16.msra.mxu0 0
    %1015 = vmatprep.subr.bf16.mxu0 0
    %1016 = vmatpush1.bf16.msra.mxu0 0
    %1017 = vmatprep.mubr.bf16.mxu0 0
    %1018 = vmatmul.mubr.bf16.gmra.mrb[0].mxu0 %v913
    %v1019 = vpop.f32.mrb[0].mxu0
    %v1020 = vadd.f32 %v935, %v1019
    %v1021 = vpop.f32.mrb[0].mxu0
    %v1022 = vpop.f32.mrb[0].mxu0
    %v1023 = vpop.f32.mrb[0].mxu0
    %1024 = vdwg.mxu0
    %1025 = vst [vmem:[#allocation15] sm:$0xff] %v1020
    // Predicated region
    $region90: #{tpu_custom_call.1} parent=1 // pred_check
      _
    $region91: #{tpu_custom_call.1} parent=1 // pred_check_branch
      %1027 = sbr.rel (0) target = $region93
    $region92: #{tpu_custom_call.1} parent=1 // pred_region
      %s1029 = ssub.s32 256, 256
      %1030 = vsyncadd [#allocation6], %s1029
      %s1032 = sshll.u32 [#allocation15], 4
      %s1033 = int_to_ptr.vmem [resolvable:$true] %s1032
      %1035 = dma.vmem_to_hbm [thread:$0]  %s1033, 256, %s13, [#allocation6]
    $region93: #{tpu_custom_call.1} parent=1 // pred_fallthru
      _
    // Predicated region
    $region94: #{tpu_custom_call.1} parent=1 // pred_check
      _
    $region95: #{tpu_custom_call.1} parent=1 // pred_check_branch
      %1037 = sbr.rel (0) target = $region97
    $region96: #{tpu_custom_call.1} parent=1 // pred_region
      %s1039 = ssub.s32 256, 256
      %1040 = vsyncadd [#allocation17], %s1039
      %s1042 = sshll.u32 [#allocation16], 4
      %s1043 = int_to_ptr.vmem [resolvable:$true] %s1042
      %1045 = dma.vmem_to_hbm [thread:$0]  %s1043, 256, %s14, [#allocation17]
    $region97: #{tpu_custom_call.1} parent=1 // pred_fallthru
      _
    // Predicated region
    $region98: #{tpu_custom_call.1} parent=1 // pred_check
      _
    $region99: #{tpu_custom_call.1} parent=1 // pred_check_branch
      %1047 = sbr.rel (0) target = $region101
    $region100: #{tpu_custom_call.1} parent=1 // pred_region
      %1048 = dma.done [#allocation6], 256
    $region101: #{tpu_custom_call.1} parent=1 // pred_fallthru
      _
    // Predicated region
    $region102: #{tpu_custom_call.1} parent=1 // pred_check
      _
    $region103: #{tpu_custom_call.1} parent=1 // pred_check_branch
      %1050 = sbr.rel (0) target = $region105
    $region104: #{tpu_custom_call.1} parent=1 // pred_region
      %1051 = dma.done [#allocation17], 256
    $region105: #{tpu_custom_call.1} parent=1 // pred_fallthru
      _
    %1052 = vsyncpa [#allocation5], 1
    %1053 = vsyncpa [#allocation8], 1
    %1054 = vsyncpa [#allocation11], 1
    %1055 = vsyncpa [#allocation14], 1
    %1056 = vsyncpa [#allocation6], 1
    %1057 = vsyncpa [#allocation17], 1

</llo_original>
